<compile_context>
chip_gen: v5e
topology: v5e:2x2
jax: 0.10.0
libtpu: 0.0.40
codegen_flags: <defaults>
</compile_context>

<pallas_src>
import jax
import jax.numpy as jnp
from jax import lax
from jax.experimental import pallas as pl
from jax.experimental.pallas import tpu as pltpu

# ----------------------------------------------------------------------------
# Slot vocabulary (synthetic "lang.n_state_values") - 35 DST heads
# ----------------------------------------------------------------------------
SLOT_NAMES = [
    "bus-leaveat", "train-arriveby", "bus-departure", "train-departure",
    "hotel-internet", "attraction-type", "taxi-leaveat", "hotel-parking",
    "train-bookpeople", "taxi-arriveby", "hotel-bookstay", "hotel-stars",
    "hospital-department", "hotel-bookday", "attraction-area", "hotel-type",
    "restaurant-area", "restaurant-booktime", "hotel-pricerange",
    "restaurant-food", "hotel-area", "restaurant-bookday", "hotel-bookpeople",
    "attraction-name", "train-destination", "restaurant-bookpeople",
    "bus-destination", "restaurant-name", "train-leaveat", "taxi-destination",
    "hotel-name", "restaurant-pricerange", "bus-day", "taxi-departure",
    "train-day",
]
# deterministic, small per-slot vocab sizes
N_STATE_VALUES = {name: 3 + (i % 11) * 2 for i, name in enumerate(SLOT_NAMES)}

LN_EPS = 1e-12                   # BERT LayerNorm eps
_INV_SQRT2 = 0.7071067811865476  # hoisted 1/sqrt(2) constant


def _gelu_exact(x):
    # matches torch.nn.functional.gelu (erf form), the BERT default activation
    return 0.5 * x * (1.0 + lax.erf(x * _INV_SQRT2))


# ----------------------------------------------------------------------------
# Pallas kernels
# ----------------------------------------------------------------------------
def lm_head_kernel(x_ref, wt_ref, bt_ref, ln_g_ref, ln_b_ref, wd_ref, bd_ref,
                   o_ref, h_ref):
    """Tiled BertLMPredictionHead: dense(H,H)->GELU->LayerNorm->dense(H,V).

    grid = (M_tiles, V_tiles); V is the inner "arbitrary" axis.  The transform
    is computed once per M tile and cached (bf16) in h_ref.
    """
    @pl.when(pl.program_id(1) == 0)
    def _():
        # bf16 x bf16 -> single-pass MXU with f32 accumulation
        x = x_ref[...].astype(jnp.bfloat16)                         # [tm, H]
        h = jnp.dot(x, wt_ref[...], preferred_element_type=jnp.float32)
        h = h + bt_ref[...]
        h = _gelu_exact(h)
        # two-pass LayerNorm (numerically matches the torch reference)
        mu = jnp.mean(h, axis=-1, keepdims=True)
        c = h - mu
        var = jnp.mean(c * c, axis=-1, keepdims=True)
        h = c * lax.rsqrt(var + LN_EPS) * ln_g_ref[...] + ln_b_ref[...]
        h_ref[...] = h.astype(h_ref.dtype)                          # cache bf16

    # decoder matmul for this [tm, tv] vocab tile (bf16 MXU, f32 accumulate)
    o_ref[...] = (jnp.dot(h_ref[...], wd_ref[...],
                          preferred_element_type=jnp.float32)
                  + bd_ref[...]).astype(o_ref.dtype)


def fused_heads_kernel(x_ref, w_ref, b_ref, o_ref):
    """All DST heads + user-intent head as one fused matmul on pooled_output.

    Output width is pre-padded to a multiple of 128 (lane-dense stores).
    GradReverseLayerFunction is the identity in the forward pass.
    """
    o_ref[...] = (jnp.dot(x_ref[...], w_ref[...],
                          preferred_element_type=jnp.float32)
                  + b_ref[...]).astype(o_ref.dtype)


def _vmem_spec():
    return pl.BlockSpec(memory_space=pltpu.MemorySpace.VMEM)


# ----------------------------------------------------------------------------
# Tiling / VMEM budgeting helpers
# ----------------------------------------------------------------------------
def _choose_tm(M, pref, align=8, min_tiles=4):
    """Largest aligned M tile <= pref that still yields >= min_tiles tiles
    (keeps both v7x TensorCores busy on the 'parallel' M axis)."""
    if M <= pref:
        return M
    tm = max(align, (pref // align) * align)
    while M // tm < min_tiles and tm > align:
        tm = max(align, (tm // 2 // align) * align)
    return tm


def _choose_tv(V, pref, align=128):
    if V <= pref:
        return V
    return max(align, (pref // align) * align)


def _vmem_limit_bytes(tm, tv, H, lm_out_bytes):
    """Scoped-VMEM limit from the actual working set.

    >= 32 MiB (v5e's 16 MiB default scoped limit already fails at BERT sizes),
    <= 48 MiB (headroom under v7x's 64 MiB physical VMEM).
    """
    est = (2 * tm * H * 4          # x tile, f32, double-buffered
           + 1 * H * H * 2         # transform_w, bf16, single-buffered
           + 3 * H * 4             # transform_b / ln_g / ln_b, single-buffered
           + 2 * H * tv * 2        # decoder_w tile, bf16, double-buffered
           + 2 * tv * 4            # decoder_b tile, double-buffered
           + 2 * tm * tv * lm_out_bytes   # output tile, double-buffered
           + tm * H * 2)           # h scratch, bf16
    est = est * 3 // 2             # compiler-internal scratch headroom
    return int(min(max(est, 32 * 2**20), 48 * 2**20))


# ----------------------------------------------------------------------------
# Parameter construction (deterministic, synthetic)
# ----------------------------------------------------------------------------
def init_params(key, hidden_size, vocab_size, num_labels):
    ks = iter(jax.random.split(key, 16 + 2 * (len(SLOT_NAMES) + 1)))
    scale = 0.02

    def dense(k, fan_in, fan_out):
        return scale * jax.random.normal(k, (fan_in, fan_out), jnp.float32)

    params = {
        # BertLMPredictionHead -- big weights are pre-cast to bf16 ONCE here so
        # no per-forward XLA cast (and no duplicate f32 copy) exists in HBM.
        "transform_w": dense(next(ks), hidden_size, hidden_size
                             ).astype(jnp.bfloat16),
        "transform_b": scale * jax.random.normal(next(ks), (1, hidden_size),
                                                 jnp.float32),
        "ln_g": jnp.ones((1, hidden_size), jnp.float32),
        "ln_b": jnp.zeros((1, hidden_size), jnp.float32),
        "decoder_w": dense(next(ks), hidden_size, vocab_size
                           ).astype(jnp.bfloat16),
        "decoder_b": scale * jax.random.normal(next(ks), (1, vocab_size),
                                               jnp.float32),
    }

    # 35 DST heads + user-intent head fused along the output axis,
    # zero-padded up to a multiple of 128 for lane-dense stores.
    head_sizes = [N_STATE_VALUES[n] for n in SLOT_NAMES] + [num_labels]
    w_parts, b_parts = [], []
    for sz in head_sizes:
        w_parts.append(dense(next(ks), hidden_size, sz))
        b_parts.append(scale * jax.random.normal(next(ks), (sz,), jnp.float32))
    total = sum(head_sizes)
    pad = (-total) % 128
    if pad:
        w_parts.append(jnp.zeros((hidden_size, pad), jnp.float32))
        b_parts.append(jnp.zeros((pad,), jnp.float32))
    params["heads_w"] = jnp.concatenate(w_parts, axis=1)     # [H, padded_out]
    params["heads_b"] = jnp.concatenate(b_parts)[None, :]    # [1, padded_out]
    params["head_sizes"] = head_sizes
    return params


# ----------------------------------------------------------------------------
# Pallas-backed forward pieces
# ----------------------------------------------------------------------------
def lm_prediction_head(params, x_flat, *, tm_pref=512, tv_pref=2048,
                       lm_logits_dtype=jnp.bfloat16):
    M, H = x_flat.shape
    V = params["decoder_w"].shape[1]
    tm = _choose_tm(M, tm_pref, align=8, min_tiles=4)
    tv = _choose_tv(V, tv_pref, align=128)
    grid = (pl.cdiv(M, tm), pl.cdiv(V, tv))
    lm_out_bytes = jnp.dtype(lm_logits_dtype).itemsize

    cost = pl.CostEstimate(
        flops=2 * M * H * (H + V),
        transcendentals=M * H,  # one erf per transformed element
        bytes_accessed=(M * H * 4 + H * H * 2 + H * V * 2
                        + M * V * lm_out_bytes),
    )

    return pl.pallas_call(
        lm_head_kernel,
        out_shape=jax.ShapeDtypeStruct((M, V), lm_logits_dtype),
        grid_spec=pltpu.PrefetchScalarGridSpec(
            num_scalar_prefetch=0,
            grid=grid,
            in_specs=[
                # x: block only changes on the outer M axis; kept at the
                # default 2 buffers so its DMA overlaps the previous tile's
                # final V steps (only tm*H*4 bytes of VMEM).
                pl.BlockSpec((tm, H), lambda i, j: (i, 0)),
                # constant-index operands: single-buffered, pure VMEM savings.
                pl.BlockSpec((H, H), lambda i, j: (0, 0),
                             pipeline_mode=pl.Buffered(1)),   # transform_w
                pl.BlockSpec((1, H), lambda i, j: (0, 0),
                             pipeline_mode=pl.Buffered(1)),   # transform_b
                pl.BlockSpec((1, H), lambda i, j: (0, 0),
                             pipeline_mode=pl.Buffered(1)),   # LN gamma
                pl.BlockSpec((1, H), lambda i, j: (0, 0),
                             pipeline_mode=pl.Buffered(1)),   # LN beta
                # decoder_w changes every inner step: keep default double
                # buffering; raise to pl.Buffered(3) if its DMA is still
                # exposed after profiling (VMEM budget allows it).
                pl.BlockSpec((H, tv), lambda i, j: (0, j)),   # decoder_w tile
                pl.BlockSpec((1, tv), lambda i, j: (0, j)),   # decoder_b tile
            ],
            out_specs=pl.BlockSpec((tm, tv), lambda i, j: (i, j)),
            scratch_shapes=[pltpu.VMEM((tm, H), jnp.bfloat16)],   # cached h
        ),
        compiler_params=pltpu.CompilerParams(
            dimension_semantics=("parallel", "arbitrary"),
            vmem_limit_bytes=_vmem_limit_bytes(tm, tv, H, lm_out_bytes)),
        cost_estimate=cost,
    )(x_flat, params["transform_w"], params["transform_b"], params["ln_g"],
      params["ln_b"], params["decoder_w"], params["decoder_b"])


def fused_dst_heads(params, pooled_output):
    # Tiny [B,H]x[H,~384] matmul; not worth tuning -- single un-gridded call.
    B, H = pooled_output.shape
    P = params["heads_w"].shape[1]   # already padded to a multiple of 128
    return pl.pallas_call(
        fused_heads_kernel,
        out_shape=jax.ShapeDtypeStruct((B, P), jnp.float32),
        in_specs=[_vmem_spec()] * 3,
        out_specs=_vmem_spec(),
    )(pooled_output, params["heads_w"], params["heads_b"])


# ----------------------------------------------------------------------------
# Forward pass wrapper
# ----------------------------------------------------------------------------
def pretraining_heads_forward(params, sequence_output, pooled_output,
                              lm_logits_dtype=jnp.bfloat16):
    B, S, H = sequence_output.shape
    V = params["decoder_w"].shape[1]

    # ---- LM prediction head (tiled Pallas kernel, bf16 logits) ----
    lm_flat = lm_prediction_head(params, sequence_output.reshape(B * S, H),
                                 lm_logits_dtype=lm_logits_dtype)
    lm_prediction_scores = lm_flat.reshape(B, S, V)

    # ---- DST + user-intent heads (single fused, lane-dense Pallas matmul) ----
    fused = fused_dst_heads(params, pooled_output)

    head_outputs = []
    off = 0
    for sz in params["head_sizes"]:
        head_outputs.append(fused[:, off:off + sz])
        off += sz

    # tuple order matches the PyTorch module's return tuple (37 elements).
    return (lm_prediction_scores,) + tuple(head_outputs)


# ----------------------------------------------------------------------------
# Plain-JAX reference (f32 math, erf-GELU, torch semantics) for sanity check
# ----------------------------------------------------------------------------
def reference_forward(params, sequence_output, pooled_output):
    B, S, H = sequence_output.shape
    x = sequence_output.reshape(B * S, H)
    wt = params["transform_w"].astype(jnp.float32)
    wd = params["decoder_w"].astype(jnp.float32)
    h = x @ wt + params["transform_b"]
    h = _gelu_exact(h)
    mu = jnp.mean(h, axis=-1, keepdims=True)
    var = jnp.mean((h - mu) ** 2, axis=-1, keepdims=True)
    h = (h - mu) * lax.rsqrt(var + LN_EPS) * params["ln_g"] + params["ln_b"]
    lm = (h @ wd + params["decoder_b"]).reshape(B, S, -1)
    fused = pooled_output @ params["heads_w"] + params["heads_b"]
    outs, off = [], 0
    for sz in params["head_sizes"]:
        outs.append(fused[:, off:off + sz])
        off += sz
    return (lm,) + tuple(outs)


# ----------------------------------------------------------------------------
if __name__ == "__main__":
    B, S, H = 2, 8, 32          # batch, sequence length, hidden size
    VOCAB = 128                 # synthetic vocab size for the LM head
    NUM_LABELS = 7              # config.num_labels for the user-intent head

    key = jax.random.PRNGKey(0)
    k_param, k_seq, k_pool = jax.random.split(key, 3)

    params = init_params(k_param, H, VOCAB, NUM_LABELS)
    sequence_output = jax.random.normal(k_seq, (B, S, H), jnp.float32)
    pooled_output = jax.random.normal(k_pool, (B, H), jnp.float32)

    outputs = pretraining_heads_forward(params, sequence_output, pooled_output)
    outputs = jax.block_until_ready(outputs)

    # sanity check against a plain-JAX f32 reference
    ref_outputs = reference_forward(params, sequence_output, pooled_output)
    assert len(outputs) == 37, f"expected 37 outputs, got {len(outputs)}"
    # LM head runs a bf16 pipeline (bf16 weights / h cache / logits): looser atol.
    lm_got, lm_ref = outputs[0], ref_outputs[0]
    assert lm_got.shape == lm_ref.shape
    assert jnp.allclose(lm_got.astype(jnp.float32), lm_ref,
                        rtol=2e-2, atol=1e-2), "LM head mismatch vs reference"
    # DST / intent heads are f32 end-to-end.
    for got, ref in zip(outputs[1:], ref_outputs[1:]):
        assert got.shape == ref.shape
        assert jnp.allclose(got, ref, rtol=2e-2, atol=5e-3), \
            "DST head mismatch vs reference"

    # TODO(synk): GradReverseLayerFunction only affects the backward pass
    # (gradient reversal); the forward pass is the identity and is modeled so.
    print("KERNEL_OK")
</pallas_src>

<mosaic_0001>
module attributes {stable_mosaic.version = 11 : i64} {
  func.func @lm_head_kernel(%arg0: i32, %arg1: i32, %arg2: memref<16x32xf32, #tpu.memory_space<vmem>>, %arg3: memref<32x32xbf16, #tpu.memory_space<vmem>>, %arg4: memref<1x32xf32, #tpu.memory_space<vmem>>, %arg5: memref<1x32xf32, #tpu.memory_space<vmem>>, %arg6: memref<1x32xf32, #tpu.memory_space<vmem>>, %arg7: memref<32x128xbf16, #tpu.memory_space<vmem>>, %arg8: memref<1x128xf32, #tpu.memory_space<vmem>>, %arg9: memref<16x128xbf16, #tpu.memory_space<vmem>>, %arg10: memref<16x32xbf16, #tpu.memory_space<vmem>>) attributes {dimension_semantics = [#tpu.dimension_semantics<parallel>, #tpu.dimension_semantics<arbitrary>], iteration_bounds = array<i64: 1, 1>, scalar_prefetch = 0 : i64, scratch_operands = 1 : i64, tpu.core_type = #tpu.core_type<tc>, window_params = [{transform_indices = @transform_0, window_bounds = array<i64: 16, 32>}, {pipeline_mode = #tpu.pipeline_mode<synchronous>, transform_indices = @transform_1, window_bounds = array<i64: 32, 32>}, {pipeline_mode = #tpu.pipeline_mode<synchronous>, transform_indices = @transform_2, window_bounds = array<i64: 1, 32>}, {pipeline_mode = #tpu.pipeline_mode<synchronous>, transform_indices = @transform_3, window_bounds = array<i64: 1, 32>}, {pipeline_mode = #tpu.pipeline_mode<synchronous>, transform_indices = @transform_4, window_bounds = array<i64: 1, 32>}, {transform_indices = @transform_5, window_bounds = array<i64: 32, 128>}, {transform_indices = @transform_6, window_bounds = array<i64: 1, 128>}, {transform_indices = @transform_7, window_bounds = array<i64: 16, 128>}]} {
    %c0_i32 = arith.constant 0 : i32
    %0 = arith.cmpi eq, %arg1, %c0_i32 : i32
    %1 = arith.extui %0 : i1 to i32
    %c0_i32_0 = arith.constant 0 : i32
    %2 = arith.cmpi ne, %1, %c0_i32_0 : i32
    scf.if %2 {
      %c0_8 = arith.constant 0 : index
      %c0_9 = arith.constant 0 : index
      %11 = vector.load %arg2[%c0_8, %c0_9] : memref<16x32xf32, #tpu.memory_space<vmem>>, vector<16x32xf32>
      %12 = arith.truncf %11 : vector<16x32xf32> to vector<16x32xbf16>
      %c0_10 = arith.constant 0 : index
      %c0_11 = arith.constant 0 : index
      %13 = vector.load %arg3[%c0_10, %c0_11] : memref<32x32xbf16, #tpu.memory_space<vmem>>, vector<32x32xbf16>
      %cst_12 = arith.constant dense<0.000000e+00> : vector<16x32xf32>
      %14 = tpu.matmul %12, %13, %cst_12 {dimension_numbers = #tpu.dot_dimension_numbers<[1], [0], [0], [1], [0, 0, 1, 1], [], []>} : vector<16x32xbf16>, vector<32x32xbf16>, vector<16x32xf32> -> vector<16x32xf32>
      %c0_13 = arith.constant 0 : index
      %c0_14 = arith.constant 0 : index
      %15 = vector.load %arg4[%c0_13, %c0_14] : memref<1x32xf32, #tpu.memory_space<vmem>>, vector<1x32xf32>
      %16 = vector.broadcast %15 : vector<1x32xf32> to vector<16x32xf32>
      %17 = arith.addf %14, %16 : vector<16x32xf32>
      %cst_15 = arith.constant 5.000000e-01 : f32
      %18 = vector.broadcast %cst_15 : f32 to vector<16x32xf32>
      %19 = arith.mulf %18, %17 : vector<16x32xf32>
      %cst_16 = arith.constant 0.707106769 : f32
      %20 = vector.broadcast %cst_16 : f32 to vector<16x32xf32>
      %21 = arith.mulf %17, %20 : vector<16x32xf32>
      %22 = math.erf %21 : vector<16x32xf32>
      %cst_17 = arith.constant 1.000000e+00 : f32
      %23 = vector.broadcast %cst_17 : f32 to vector<16x32xf32>
      %24 = arith.addf %23, %22 : vector<16x32xf32>
      %25 = arith.mulf %19, %24 : vector<16x32xf32>
      %cst_18 = arith.constant dense<0.000000e+00> : vector<16xf32>
      %26 = vector.multi_reduction <add>, %25, %cst_18 [1] : vector<16x32xf32> to vector<16xf32>
      %27 = vector.shape_cast %26 : vector<16xf32> to vector<16x1xf32>
      %cst_19 = arith.constant 3.200000e+01 : f32
      %28 = vector.broadcast %cst_19 : f32 to vector<16x1xf32>
      %29 = arith.divf %27, %28 : vector<16x1xf32>
      %30 = vector.broadcast %29 : vector<16x1xf32> to vector<16x32xf32>
      %31 = arith.subf %25, %30 : vector<16x32xf32>
      %32 = arith.mulf %31, %31 : vector<16x32xf32>
      %cst_20 = arith.constant dense<0.000000e+00> : vector<16xf32>
      %33 = vector.multi_reduction <add>, %32, %cst_20 [1] : vector<16x32xf32> to vector<16xf32>
      %34 = vector.shape_cast %33 : vector<16xf32> to vector<16x1xf32>
      %cst_21 = arith.constant 3.200000e+01 : f32
      %35 = vector.broadcast %cst_21 : f32 to vector<16x1xf32>
      %36 = arith.divf %34, %35 : vector<16x1xf32>
      %cst_22 = arith.constant 9.99999996E-13 : f32
      %37 = vector.broadcast %cst_22 : f32 to vector<16x1xf32>
      %38 = arith.addf %36, %37 : vector<16x1xf32>
      %39 = math.rsqrt %38 : vector<16x1xf32>
      %40 = vector.broadcast %39 : vector<16x1xf32> to vector<16x32xf32>
      %41 = arith.mulf %31, %40 : vector<16x32xf32>
      %c0_23 = arith.constant 0 : index
      %c0_24 = arith.constant 0 : index
      %42 = vector.load %arg5[%c0_23, %c0_24] : memref<1x32xf32, #tpu.memory_space<vmem>>, vector<1x32xf32>
      %43 = vector.broadcast %42 : vector<1x32xf32> to vector<16x32xf32>
      %44 = arith.mulf %41, %43 : vector<16x32xf32>
      %c0_25 = arith.constant 0 : index
      %c0_26 = arith.constant 0 : index
      %45 = vector.load %arg6[%c0_25, %c0_26] : memref<1x32xf32, #tpu.memory_space<vmem>>, vector<1x32xf32>
      %46 = vector.broadcast %45 : vector<1x32xf32> to vector<16x32xf32>
      %47 = arith.addf %44, %46 : vector<16x32xf32>
      %48 = arith.truncf %47 : vector<16x32xf32> to vector<16x32xbf16>
      %c0_27 = arith.constant 0 : index
      %c0_28 = arith.constant 0 : index
      %49 = vector.load %arg10[%c0_27, %c0_28] : memref<16x32xbf16, #tpu.memory_space<vmem>>, vector<16x32xbf16>
      tpu.vector_store %arg10[%c0_27, %c0_28], %48 {strides = array<i32>} : memref<16x32xbf16, #tpu.memory_space<vmem>>, vector<16x32xbf16>,
    } else {
    }
    %c0 = arith.constant 0 : index
    %c0_1 = arith.constant 0 : index
    %3 = vector.load %arg10[%c0, %c0_1] : memref<16x32xbf16, #tpu.memory_space<vmem>>, vector<16x32xbf16>
    %c0_2 = arith.constant 0 : index
    %c0_3 = arith.constant 0 : index
    %4 = vector.load %arg7[%c0_2, %c0_3] : memref<32x128xbf16, #tpu.memory_space<vmem>>, vector<32x128xbf16>
    %cst = arith.constant dense<0.000000e+00> : vector<16x128xf32>
    %5 = tpu.matmul %3, %4, %cst {dimension_numbers = #tpu.dot_dimension_numbers<[1], [0], [0], [1], [0, 0, 1, 1], [], []>} : vector<16x32xbf16>, vector<32x128xbf16>, vector<16x128xf32> -> vector<16x128xf32>
    %c0_4 = arith.constant 0 : index
    %c0_5 = arith.constant 0 : index
    %6 = vector.load %arg8[%c0_4, %c0_5] : memref<1x128xf32, #tpu.memory_space<vmem>>, vector<1x128xf32>
    %7 = vector.broadcast %6 : vector<1x128xf32> to vector<16x128xf32>
    %8 = arith.addf %5, %7 : vector<16x128xf32>
    %9 = arith.truncf %8 : vector<16x128xf32> to vector<16x128xbf16>
    %c0_6 = arith.constant 0 : index
    %c0_7 = arith.constant 0 : index
    %10 = vector.load %arg9[%c0_6, %c0_7] : memref<16x128xbf16, #tpu.memory_space<vmem>>, vector<16x128xbf16>
    tpu.vector_store %arg9[%c0_6, %c0_7], %9 {strides = array<i32>} : memref<16x128xbf16, #tpu.memory_space<vmem>>, vector<16x128xbf16>,
    return
  }
  func.func @transform_0(%arg0: i32, %arg1: i32) -> (i32, i32) {
    %c0_i32 = arith.constant 0 : i32
    %c0_i32_0 = arith.constant 0 : i32
    return %arg0, %c0_i32 : i32, i32
  }
  func.func @transform_1(%arg0: i32, %arg1: i32) -> (i32, i32) {
    %c0_i32 = arith.constant 0 : i32
    %c0_i32_0 = arith.constant 0 : i32
    %c0_i32_1 = arith.constant 0 : i32
    return %c0_i32, %c0_i32_0 : i32, i32
  }
  func.func @transform_2(%arg0: i32, %arg1: i32) -> (i32, i32) {
    %c0_i32 = arith.constant 0 : i32
    %c0_i32_0 = arith.constant 0 : i32
    %c0_i32_1 = arith.constant 0 : i32
    return %c0_i32, %c0_i32_0 : i32, i32
  }
  func.func @transform_3(%arg0: i32, %arg1: i32) -> (i32, i32) {
    %c0_i32 = arith.constant 0 : i32
    %c0_i32_0 = arith.constant 0 : i32
    %c0_i32_1 = arith.constant 0 : i32
    return %c0_i32, %c0_i32_0 : i32, i32
  }
  func.func @transform_4(%arg0: i32, %arg1: i32) -> (i32, i32) {
    %c0_i32 = arith.constant 0 : i32
    %c0_i32_0 = arith.constant 0 : i32
    %c0_i32_1 = arith.constant 0 : i32
    return %c0_i32, %c0_i32_0 : i32, i32
  }
  func.func @transform_5(%arg0: i32, %arg1: i32) -> (i32, i32) {
    %c0_i32 = arith.constant 0 : i32
    %c0_i32_0 = arith.constant 0 : i32
    return %c0_i32, %arg1 : i32, i32
  }
  func.func @transform_6(%arg0: i32, %arg1: i32) -> (i32, i32) {
    %c0_i32 = arith.constant 0 : i32
    %c0_i32_0 = arith.constant 0 : i32
    return %c0_i32, %arg1 : i32, i32
  }
  func.func @transform_7(%arg0: i32, %arg1: i32) -> (i32, i32) {
    %c0_i32 = arith.constant 0 : i32
    return %arg0, %arg1 : i32, i32
  }
}

</mosaic_0001>

<llo_original>
// kernel: tpu_custom_call.1
$region0: #{tpu_custom_call.1}
  #allocation0 [shape = 'u32[]', space=smem, size = 0x4, offset = 0x4, fixed_abs, tag = 'smem constant byte address 0x4 - core index']
  #allocation1 [shape = 'u32[72,128]{1,0:T(1,128)}', space=vmem, size = 0x9000, scoped, tag = 'internal scratch']
  #allocation2 [shape = 'bf16[16,32]{1,0:T(8,128)(2,1)}', space=vmem, size = 0x1000, scoped, tag = 'scratch operand']
  %s0 = inlined_call_operand.hbm [shape: f32[16,32], index: 0, kind: input, shape index: {}]
  %s1 = inlined_call_operand.hbm [shape: bf16[32,32], index: 1, kind: input, shape index: {}]
  %s2 = inlined_call_operand.vmem [shape: f32[1,32], index: 2, kind: input, shape index: {}]
  %s3 = inlined_call_operand.vmem [shape: f32[1,32], index: 3, kind: input, shape index: {}]
  %s4 = inlined_call_operand.vmem [shape: f32[1,32], index: 4, kind: input, shape index: {}]
  %s5 = inlined_call_operand.hbm [shape: bf16[32,128], index: 5, kind: input, shape index: {}]
  %s6 = inlined_call_operand.vmem [shape: f32[1,128], index: 6, kind: input, shape index: {}]
  %s7 = inlined_call_operand.hbm [shape: bf16[16,128], index: 7, kind: output, shape index: {}]
  %s8 = sld [smem:[#allocation0]]
  $region54: #{tpu_custom_call.1} parent=0
    _
  %s10 = ssub.s32 1, %s8
  %s11 = scalar_select 0, %s10, %s8
  $region1: #{tpu_custom_call.1} parent=0
    #allocation3 [shape = 'u8[8192]{0}', space=vmem, size = 0x2000, scoped, tag = 'input window, operand 0, single buffered']
    #allocation4 [shape = 's32[1]{0}', space=sflag, size = 0x4, scoped, tag = 'scoped memory for tpu_custom_call.1']
    #allocation5 [shape = 's32[1]{0}', space=sflag, size = 0x4, scoped, tag = 'scoped memory for tpu_custom_call.1']
    #allocation6 [shape = 'u8[8192]{0}', space=vmem, size = 0x2000, scoped, tag = 'input window, operand 1, single buffered']
    #allocation7 [shape = 's32[1]{0}', space=sflag, size = 0x4, scoped, tag = 'scoped memory for tpu_custom_call.1']
    #allocation8 [shape = 'u8[8192]{0}', space=vmem, size = 0x2000, scoped, tag = 'input window, operand 5, single buffered']
    #allocation9 [shape = 'u8[4096]{0}', space=vmem, size = 0x1000, scoped, tag = 'output window, operand 0, single buffered']
    %12 = vsyncpa [#allocation4], 0
    %13 = vsyncpa [#allocation7], 0
    %14 = vsyncpa [#allocation5], 0
    // Predicated region
    $region2: #{tpu_custom_call.1} parent=1 // pred_check
      _
    $region3: #{tpu_custom_call.1} parent=1 // pred_check_branch
      %16 = sbr.rel (0) target = $region5
    $region4: #{tpu_custom_call.1} parent=1 // pred_region
      %18 = vsyncadd [#allocation4], 0
      %s19 = sshll.u32 %s0, 4
      %s20 = int_to_ptr.hbm [resolvable:$true] %s19
      %s21 = sshll.u32 [#allocation3], 4
      %s22 = int_to_ptr.vmem [resolvable:$true] %s21
      %27 = dma.hbm_to_vmem [thread:$0]  %s20, 256, %s22, [#allocation4], 128, 128, 8
    $region5: #{tpu_custom_call.1} parent=1 // pred_fallthru
      _
    // Predicated region
    $region6: #{tpu_custom_call.1} parent=1 // pred_check
      _
    $region7: #{tpu_custom_call.1} parent=1 // pred_check_branch
      %29 = sbr.rel (0) target = $region9
    $region8: #{tpu_custom_call.1} parent=1 // pred_region
      %31 = vsyncadd [#allocation7], 0
      %s32 = sshll.u32 %s1, 4
      %s33 = int_to_ptr.hbm [resolvable:$true] %s32
      %s34 = sshll.u32 [#allocation6], 4
      %s35 = int_to_ptr.vmem [resolvable:$true] %s34
      %40 = dma.hbm_to_vmem [thread:$0]  %s33, 256, %s35, [#allocation7], 64, 64, 4
    $region9: #{tpu_custom_call.1} parent=1 // pred_fallthru
      _
    // Predicated region
    $region10: #{tpu_custom_call.1} parent=1 // pred_check
      _
    $region11: #{tpu_custom_call.1} parent=1 // pred_check_branch
      %42 = sbr.rel (0) target = $region13
    $region12: #{tpu_custom_call.1} parent=1 // pred_region
      _
    $region13: #{tpu_custom_call.1} parent=1 // pred_fallthru
      _
    // Predicated region
    $region14: #{tpu_custom_call.1} parent=1 // pred_check
      _
    $region15: #{tpu_custom_call.1} parent=1 // pred_check_branch
      %44 = sbr.rel (0) target = $region17
    $region16: #{tpu_custom_call.1} parent=1 // pred_region
      _
    $region17: #{tpu_custom_call.1} parent=1 // pred_fallthru
      _
    // Predicated region
    $region18: #{tpu_custom_call.1} parent=1 // pred_check
      _
    $region19: #{tpu_custom_call.1} parent=1 // pred_check_branch
      %46 = sbr.rel (0) target = $region21
    $region20: #{tpu_custom_call.1} parent=1 // pred_region
      _
    $region21: #{tpu_custom_call.1} parent=1 // pred_fallthru
      _
    // Predicated region
    $region22: #{tpu_custom_call.1} parent=1 // pred_check
      _
    $region23: #{tpu_custom_call.1} parent=1 // pred_check_branch
      %48 = sbr.rel (0) target = $region25
    $region24: #{tpu_custom_call.1} parent=1 // pred_region
      %50 = vsyncadd [#allocation7], 0
      %s51 = sshll.u32 %s5, 4
      %s52 = int_to_ptr.hbm [resolvable:$true] %s51
      %s53 = sshll.u32 [#allocation8], 4
      %s54 = int_to_ptr.vmem [resolvable:$true] %s53
      %59 = dma.hbm_to_vmem [thread:$0]  %s52, 256, %s54, [#allocation7], 64, 64, 4
    $region25: #{tpu_custom_call.1} parent=1 // pred_fallthru
      _
    // Predicated region
    $region26: #{tpu_custom_call.1} parent=1 // pred_check
      _
    $region27: #{tpu_custom_call.1} parent=1 // pred_check_branch
      %61 = sbr.rel (0) target = $region29
    $region28: #{tpu_custom_call.1} parent=1 // pred_region
      _
    $region29: #{tpu_custom_call.1} parent=1 // pred_fallthru
      _
    // Predicated region
    $region30: #{tpu_custom_call.1} parent=1 // pred_check
      _
    $region31: #{tpu_custom_call.1} parent=1 // pred_check_branch
      %63 = sbr.rel (0) target = $region33
    $region32: #{tpu_custom_call.1} parent=1 // pred_region
      %65 = dma.done [#allocation4], 256
    $region33: #{tpu_custom_call.1} parent=1 // pred_fallthru
      _
    // Predicated region
    $region34: #{tpu_custom_call.1} parent=1 // pred_check
      _
    $region35: #{tpu_custom_call.1} parent=1 // pred_check_branch
      %67 = sbr.rel (0) target = $region37
    $region36: #{tpu_custom_call.1} parent=1 // pred_region
      %69 = dma.done [#allocation7], 256
    $region37: #{tpu_custom_call.1} parent=1 // pred_fallthru
      _
    // Predicated region
    $region38: #{tpu_custom_call.1} parent=1 // pred_check
      _
    $region39: #{tpu_custom_call.1} parent=1 // pred_check_branch
      %71 = sbr.rel (0) target = $region41
    $region40: #{tpu_custom_call.1} parent=1 // pred_region
      %73 = dma.done [#allocation7], 256
    $region41: #{tpu_custom_call.1} parent=1 // pred_fallthru
      _
    %p75 = scmp.eq.s32.totalorder 0, 0
    // Predicated region
    $region42: #{tpu_custom_call.1} parent=1 // pred_check
      %p76 = pneg %p75
    $region43: #{tpu_custom_call.1} parent=1 // pred_check_branch
      %78 = sbr.rel (%p76) target = $region45
    $region44: #{tpu_custom_call.1} parent=1 // pred_region
      %v79 = vld [vmem:[#allocation3] sm:$0xff]
      %v80 = vld [vmem:[#allocation3 + $0x8] sm:$0xff]
      %v81 = vpack.c.bf16 %v80, %v79
      %v82 = vld [vmem:[#allocation6] sm:$0xf]
      %v83 = vld [vmem:[#allocation6 + $0x4] sm:$0xf]
      %v84 = vld [vmem:[#allocation6 + $0x8] sm:$0xf]
      %v85 = vld [vmem:[#allocation6 + $0xc] sm:$0xf]
      %v86 = vld [vmem:[%s2] sm:$0x1]
      %v88 = vperm.slane %v86, 0
      %v94 = vunpack.c.l.b16 %v82
      %v95 = vunpack.c.l.b16 %v83
      %v96 = vunpack.c.l.b16 %v84
      %v97 = vunpack.c.l.b16 %v85
      %v98 = vpack.c.b16 %v95, %v94
      %v99 = vpack.c.b16 %v97, %v96
      %vm102 = vcmask 261120
      %v104 = vsel %vm102, %v81, 0
      %106 = vmatpush.bf16.msra.mxu0 0
      %107 = vmatpush.bf16.msra.mxu0 0
      %108 = vmatpush.bf16.msra.mxu0 0
      %109 = vmatpush.bf16.msra.mxu0 0
      %110 = vmatpush.bf16.msra.mxu0 0
      %111 = vmatpush.bf16.msra.mxu0 0
      %112 = vmatpush.bf16.msra.mxu0 %v99
      %113 = vmatpush.bf16.msra.mxu0 %v98
      %114 = vmatmul.bf16.gmra.mxu0 %v104
      %v115 = vpop.f32.mrf.mxu0
      %v116 = vadd.f32 %v88, %v115
      %v117 = vpop.f32.mrf.mxu0
      %v118 = vadd.f32 %v88, %v117
      %119 = vdwg.mxu0
      %v120 = vmul.f32 %v116, 0.5
      %v121 = vmul.f32 %v118, 0.5
      %v122 = vmul.f32 %v116, 0.70710677
      %v123 = vmul.f32 %v118, 0.70710677
      %v124 = vmul.f32 %v122, %v122
      %v125 = vmin.f32 16.0, %v124
      %v126 = vmul.f32 %v125, 2.1237322e-06
      %v127 = vadd.f32 %v126, 0.00028619796
      %v128 = vmul.f32 %v125, %v127
      %v129 = vadd.f32 %v128, 0.0036580483
      %v130 = vmul.f32 %v125, %v129
      %v131 = vadd.f32 %v130, 0.05243302
      %v132 = vmul.f32 %v125, %v131
      %v133 = vadd.f32 %v132, 0.18741608
      %v134 = vmul.f32 %v125, %v133
      %v135 = vadd.f32 %v134, 1.1283791
      %v136 = vmul.f32 %v122, %v135
      %v137 = vmul.f32 %v125, 3.8918573e-05
      %v138 = vadd.f32 %v137, 0.001143296
      %v139 = vmul.f32 %v125, %v138
      %v140 = vadd.f32 %v139, 0.014752088
      %v141 = vmul.f32 %v125, %v140
      %v142 = vadd.f32 %v141, 0.112945676
      %v143 = vmul.f32 %v125, %v142
      %v144 = vadd.f32 %v143, 0.4994258
      %v145 = vmul.f32 %v125, %v144
      %v146 = vadd.f32 %v145, 1.0
      %v147 = vrcp.pop %v146
      %v148 = vmul.f32 %v146, %v147
      %v149 = vsub.f32 1.0, %v148
      %v150 = vmul.f32 %v147, %v149
      %v151 = vadd.f32 %v147, %v150
      %vm152 = vweird.f32 %v146
      %vm153 = vweird.f32 %v147
      %vm154 = vmor %vm152, %vm153
      %v155 = vsel %vm154, %v147, %v151
      %v156 = vand.u32 2147483647, %v146
      %vm157 = vcmp.eq.f32.partialorder %v156, 8.507059e+37
      %v158 = vand.u32 %v146, 2147483648
      %v159 = vor.u32 1.1754944e-38, %v158
      %v160 = vsel %vm157, %v159, %v155
      %v161 = vmul.f32 %v136, %v160
      %v162 = vmin.f32 %v161, 1.0
      %v163 = vmax.f32 %v162, -1.0
      %v164 = vmul.f32 %v123, %v123
      %v165 = vmin.f32 16.0, %v164
      %v166 = vmul.f32 %v165, 2.1237322e-06
      %v167 = vadd.f32 %v166, 0.00028619796
      %v168 = vmul.f32 %v165, %v167
      %v169 = vadd.f32 %v168, 0.0036580483
      %v170 = vmul.f32 %v165, %v169
      %v171 = vadd.f32 %v170, 0.05243302
      %v172 = vmul.f32 %v165, %v171
      %v173 = vadd.f32 %v172, 0.18741608
      %v174 = vmul.f32 %v165, %v173
      %v175 = vadd.f32 %v174, 1.1283791
      %v176 = vmul.f32 %v123, %v175
      %v177 = vmul.f32 %v165, 3.8918573e-05
      %v178 = vadd.f32 %v177, 0.001143296
      %v179 = vmul.f32 %v165, %v178
      %v180 = vadd.f32 %v179, 0.014752088
      %v181 = vmul.f32 %v165, %v180
      %v182 = vadd.f32 %v181, 0.112945676
      %v183 = vmul.f32 %v165, %v182
      %v184 = vadd.f32 %v183, 0.4994258
      %v185 = vmul.f32 %v165, %v184
      %v186 = vadd.f32 %v185, 1.0
      %v187 = vrcp.pop %v186
      %v188 = vmul.f32 %v186, %v187
      %v189 = vsub.f32 1.0, %v188
      %v190 = vmul.f32 %v187, %v189
      %v191 = vadd.f32 %v187, %v190
      %vm192 = vweird.f32 %v186
      %vm193 = vweird.f32 %v187
      %vm194 = vmor %vm192, %vm193
      %v195 = vsel %vm194, %v187, %v191
      %v196 = vand.u32 2147483647, %v186
      %vm197 = vcmp.eq.f32.partialorder %v196, 8.507059e+37
      %v198 = vand.u32 %v186, 2147483648
      %v199 = vor.u32 1.1754944e-38, %v198
      %v200 = vsel %vm197, %v199, %v195
      %v201 = vmul.f32 %v176, %v200
      %v202 = vmin.f32 %v201, 1.0
      %v203 = vmax.f32 %v202, -1.0
      %v204 = vadd.f32 %v163, 1.0
      %v205 = vadd.f32 %v203, 1.0
      %v206 = vmul.f32 %v120, %v204
      %v207 = vmul.f32 %v121, %v205
      %v208 = vsel %vm102, %v206, 0.0
      %209 = vadd.xlane.f32.xlu0 %v208
      %v210 = vpop.xlane.xlu0 %209
      %v211 = vsel %vm102, %v207, 0.0
      %212 = vadd.xlane.f32.xlu0 %v211
      %v213 = vpop.xlane.xlu0 %212
      %v214 = vrcp.pop 32.0
      %v215 = vmul.f32 32.0, %v214
      %v216 = vsub.f32 1.0, %v215
      %v217 = vmul.f32 %v214, %v216
      %v218 = vadd.f32 %v214, %v217
      %vm219 = vweird.f32 %v214
      %v220 = vsel %vm219, %v214, %v218
      %v221 = vmul.f32 %v210, %v220
      %v222 = vmul.f32 %v213, %v220
      %v223 = vsub.f32 %v206, %v221
      %v224 = vsub.f32 %v207, %v222
      %v225 = vmul.f32 %v223, %v223
      %v226 = vmul.f32 %v224, %v224
      %v227 = vsel %vm102, %v225, 0.0
      %228 = vadd.xlane.f32.xlu0 %v227
      %v229 = vpop.xlane.xlu0 %228
      %v230 = vsel %vm102, %v226, 0.0
      %231 = vadd.xlane.f32.xlu0 %v230
      %v232 = vpop.xlane.xlu0 %231
      %v233 = vmul.f32 %v229, %v220
      %v234 = vmul.f32 %v232, %v220
      %v235 = vadd.f32 %v233, 1e-12
      %v236 = vadd.f32 %v234, 1e-12
      %v237 = vrsqrt.pop %v235
      %v238 = vmul.f32 %v237, %v235
      %v239 = vmul.f32 %v238, %v237
      %v240 = vmul.f32 0.5, %v239
      %v241 = vsub.f32 1.5, %v240
      %v242 = vmul.f32 %v237, %v241
      %vm243 = vweird.f32 %v235
      %vm244 = vweird.f32 %v237
      %vm245 = vmor %vm243, %vm244
      %v246 = vsel %vm245, %v237, %v242
      %v247 = vrsqrt.pop %v236
      %v248 = vmul.f32 %v247, %v236
      %v249 = vmul.f32 %v248, %v247
      %v250 = vmul.f32 0.5, %v249
      %v251 = vsub.f32 1.5, %v250
      %v252 = vmul.f32 %v247, %v251
      %vm253 = vweird.f32 %v236
      %vm254 = vweird.f32 %v247
      %vm255 = vmor %vm253, %vm254
      %v256 = vsel %vm255, %v247, %v252
      %v257 = vmul.f32 %v223, %v246
      %v258 = vmul.f32 %v224, %v256
      %v259 = vld [vmem:[%s3] sm:$0x1]
      %v261 = vperm.slane %v259, 0
      %v263 = vmul.f32 %v257, %v261
      %v264 = vmul.f32 %v258, %v261
      %v265 = vld [vmem:[%s4] sm:$0x1]
      %v267 = vperm.slane %v265, 0
      %v269 = vadd.f32 %v263, %v267
      %v270 = vadd.f32 %v264, %v267
      %v271 = vpack.c.bf16 %v269, %v269
      %v272 = vpack.c.bf16 %v270, %v270
      %vm273 = vcmask 257024
      %274 = vst.msk [vmem:[#allocation2] sm:$0xf] %vm273, %v271
      %275 = vst.msk [vmem:[#allocation2 + $0x4] sm:$0xf] %vm273, %v272
    $region45: #{tpu_custom_call.1} parent=1 // pred_fallthru
      _
    %v276 = vld [vmem:[#allocation2] sm:$0xf]
    %v277 = vld [vmem:[#allocation2 + $0x4] sm:$0xf]
    %v278 = vld [vmem:[#allocation8] sm:$0xf]
    %v279 = vld [vmem:[#allocation8 + $0x4] sm:$0xf]
    %v280 = vld [vmem:[#allocation8 + $0x8] sm:$0xf]
    %v281 = vld [vmem:[#allocation8 + $0xc] sm:$0xf]
    %v282 = vld [vmem:[%s6] sm:$0x1]
    %v284 = vperm.slane %v282, 0
    %v288 = vunpack.c.l.b16 %v276
    %v289 = vunpack.c.l.b16 %v277
    %v290 = vpack.c.b16 %v289, %v288
    %v295 = vunpack.c.l.b16 %v278
    %v296 = vunpack.c.l.b16 %v279
    %v297 = vunpack.c.l.b16 %v280
    %v298 = vunpack.c.l.b16 %v281
    %v299 = vpack.c.b16 %v296, %v295
    %v300 = vpack.c.b16 %v298, %v297
    %vm303 = vcmask 261120
    %v305 = vsel %vm303, %v290, 0
    %307 = vmatpush.bf16.msra.mxu0 0
    %308 = vmatpush.bf16.msra.mxu0 0
    %309 = vmatpush.bf16.msra.mxu0 0
    %310 = vmatpush.bf16.msra.mxu0 0
    %311 = vmatpush.bf16.msra.mxu0 0
    %312 = vmatpush.bf16.msra.mxu0 0
    %313 = vmatpush.bf16.msra.mxu0 %v300
    %314 = vmatpush.bf16.msra.mxu0 %v299
    %315 = vmatmul.bf16.gmra.mxu0 %v305
    %v316 = vpop.f32.mrf.mxu0
    %v317 = vadd.f32 %v284, %v316
    %v318 = vpop.f32.mrf.mxu0
    %v319 = vadd.f32 %v284, %v318
    %320 = vdwg.mxu0
    %v321 = vpack.c.bf16 %v317, %v317
    %v322 = vpack.c.bf16 %v319, %v319
    %323 = vst [vmem:[#allocation9] sm:$0xf] %v321
    %324 = vst [vmem:[#allocation9 + $0x4] sm:$0xf] %v322
    // Predicated region
    $region46: #{tpu_custom_call.1} parent=1 // pred_check
      _
    $region47: #{tpu_custom_call.1} parent=1 // pred_check_branch
      %326 = sbr.rel (0) target = $region49
    $region48: #{tpu_custom_call.1} parent=1 // pred_region
      %328 = vsyncadd [#allocation5], 0
      %s329 = sshll.u32 [#allocation9], 4
      %s330 = int_to_ptr.vmem [resolvable:$true] %s329
      %s331 = sshll.u32 %s7, 4
      %s332 = int_to_ptr.hbm [resolvable:$true] %s331
      %337 = dma.vmem_to_hbm [thread:$0]  %s330, 128, %s332, [#allocation5], 64, 64, 4
    $region49: #{tpu_custom_call.1} parent=1 // pred_fallthru
      _
    // Predicated region
    $region50: #{tpu_custom_call.1} parent=1 // pred_check
      _
    $region51: #{tpu_custom_call.1} parent=1 // pred_check_branch
      %339 = sbr.rel (0) target = $region53
    $region52: #{tpu_custom_call.1} parent=1 // pred_region
      %341 = dma.done [#allocation5], 128
    $region53: #{tpu_custom_call.1} parent=1 // pred_fallthru
      _
    %342 = vsyncpa [#allocation4], 1
    %343 = vsyncpa [#allocation7], 1
    %344 = vsyncpa [#allocation5], 1

</llo_original>
